<compile_context>
chip_gen: v7x
topology: tpu7x:2x2x1
jax: 0.10.0
libtpu: 0.0.40
codegen_flags: <defaults>
</compile_context>

<pallas_src>
import jax
import jax.numpy as jnp
import numpy as np
from jax import lax
from jax.experimental import pallas as pl
from jax.experimental.pallas import tpu as pltpu

LANE = 128


def _round_up(v, m):
    return (v + m - 1) // m * m


def gcn_fused_kernel(x_blk_ref, wt_ref, msgs_ref, dst_ref, out_ref, agg_ref):
    e = pl.program_id(1)
    tn, _ = agg_ref.shape
    te = dst_ref.shape[1]

    @pl.when(e == 0)
    def _zero_acc():
        agg_ref[...] = jnp.zeros_like(agg_ref)

    # dst one-hot (tn, te): single select straight into f32.  row_base is
    # folded into the (1, te) index row, so the per-element (tn, te) VPU work
    # is just one compare + one select.
    row_base = pl.program_id(0) * tn
    dst_local = dst_ref[...] - row_base                         # (1, te) int32
    node_iota = lax.broadcasted_iota(jnp.int32, (tn, te), 0)    # (tn, te)
    oh_dst = jnp.where(dst_local == node_iota,
                       jnp.float32(1.0), jnp.float32(0.0))      # (tn, te) f32

    # scatter_add of X[src] rows into this node-row block, on the MXU:
    #   agg[d, :] += sum_{edges in tile with dst == d} X[src_e, :]
    agg_ref[...] += jnp.dot(oh_dst, msgs_ref[...],
                            preferred_element_type=jnp.float32)

    @pl.when(e == pl.num_programs(1) - 1)
    def _finalize():
        # GCNNorm self-loop fold (+X_blk), MLPUpdate (@ W^T), relu —
        # exactly once per node block (H is never recomputed).
        pre = agg_ref[...] + x_blk_ref[...]
        out_ref[...] = jnp.maximum(
            jnp.dot(pre, wt_ref[...], preferred_element_type=jnp.float32),
            0.0)


def combined_model_forward(x, edge_index, w, *, tile_nodes=256, tile_edges=1024):
    """x: (N, F_in) f32, edge_index: (2, E) int32, w: (F_out, F_in) f32."""
    n, f_in = x.shape
    f_out = w.shape[0]
    e = edge_index.shape[1]
    # num_nodes comes from the static shape (no host-side max() / device sync).
    # TODO(synk): GCNNorm also computes deg^-1/2 normalized edge weights; they
    # are never consumed by MessageGeneration/Aggregation, so they don't affect
    # the returned `x` and are not materialized here.

    tn = max(8, tile_nodes)
    n_pad = _round_up(max(n, 1), tn)
    f_in_p = _round_up(f_in, LANE)
    f_out_p = _round_up(f_out, LANE)
    te = max(LANE, min(tile_edges, _round_up(max(e, 1), LANE)))
    e_pad = _round_up(max(e, 1), te)

    # lane-dense zero padding: features to 128 lanes, nodes to the node tile.
    x_p = jnp.pad(x.astype(jnp.float32), ((0, n_pad - n), (0, f_in_p - f_in)))
    wt_p = jnp.pad(w.astype(jnp.float32).T,
                   ((0, f_in_p - f_in), (0, f_out_p - f_out)))   # (F_in_p, F_out_p)

    src = edge_index[0].astype(jnp.int32)
    dst = edge_index[1].astype(jnp.int32)

    # MessageGeneration (reassociated): per-edge messages are X[src]; the MLP
    # matmul is applied after aggregation inside the kernel (scatter_add is
    # linear, so the result equals scatter_add(H[src], dst) with H = X @ W^T).
    # Dense lane-wide XLA gather outside the kernel; padded edge rows are zero.
    msgs = jnp.take(x_p, src, axis=0)                            # (E, F_in_p)
    msgs = jnp.pad(msgs, ((0, e_pad - e), (0, 0)))               # (E_pad, F_in_p)

    # dst as a lane-dense (1, E_pad) row; pad value -1 matches no node.
    dst_row = jnp.pad(dst, (0, e_pad - e),
                      constant_values=-1).reshape(1, e_pad)

    nb = n_pad // tn
    ne = e_pad // te

    flops = (2 * n_pad * e_pad * f_in_p            # one-hot scatter matmuls
             + 2 * n_pad * f_in_p * f_out_p)       # (agg + X) @ W^T
    bytes_accessed = 4 * (n_pad * f_in_p           # X row blocks (read once)
                          + f_in_p * f_out_p       # W^T (resident)
                          + nb * e_pad * f_in_p    # msgs streamed per node block
                          + nb * e_pad             # dst indices
                          + n_pad * f_out_p)       # out

    out_p = pl.pallas_call(
        gcn_fused_kernel,
        out_shape=jax.ShapeDtypeStruct((n_pad, f_out_p), jnp.float32),
        grid_spec=pltpu.PrefetchScalarGridSpec(
            num_scalar_prefetch=0,
            grid=(nb, ne),                                        # edge (reduction) axis last
            in_specs=[
                pl.BlockSpec((tn, f_in_p), lambda i, e_: (i, 0)),        # X row block
                pl.BlockSpec((f_in_p, f_out_p), lambda i, e_: (0, 0)),   # W^T (resident)
                pl.BlockSpec((te, f_in_p), lambda i, e_: (e_, 0)),       # gathered msgs tile
                pl.BlockSpec((1, te), lambda i, e_: (0, e_)),            # dst indices row
            ],
            out_specs=pl.BlockSpec((tn, f_out_p), lambda i, e_: (i, 0)),
            scratch_shapes=[pltpu.VMEM((tn, f_in_p), jnp.float32)],      # agg accumulator
        ),
        compiler_params=pltpu.CompilerParams(
            dimension_semantics=("parallel", "arbitrary"),  # node blocks shard across TCs
            vmem_limit_bytes=48 * 1024 * 1024,              # safe on v7x (64 MiB), ample on v5e/v6e
        ),
        cost_estimate=pl.CostEstimate(
            flops=int(flops), transcendentals=0,
            bytes_accessed=int(bytes_accessed)),
    )(x_p, wt_p, msgs, dst_row)

    return out_p[:n, :f_out]


def reference_forward(x, edge_index, w):
    """Pure-JAX reference of the same pipeline, for verification."""
    num_nodes = x.shape[0]
    loops = jnp.arange(num_nodes, dtype=jnp.int32)
    src = jnp.concatenate([edge_index[0], loops])
    dst = jnp.concatenate([edge_index[1], loops])
    h = x @ w.T
    messages = h[src]
    agg = jax.ops.segment_sum(messages, dst, num_segments=num_nodes)
    return jax.nn.relu(agg)


if __name__ == "__main__":
    key = jax.random.PRNGKey(0)
    k_x, k_w, k_src, k_dst = jax.random.split(key, 4)

    N, F_IN, F_OUT, E = 16, 16, 32, 24

    x = jax.random.normal(k_x, (N, F_IN), dtype=jnp.float32)
    w = jax.random.normal(k_w, (F_OUT, F_IN), dtype=jnp.float32) * 0.1

    src = jax.random.randint(k_src, (E,), 0, N, dtype=jnp.int32)
    dst = jax.random.randint(k_dst, (E,), 0, N, dtype=jnp.int32)
    # ensure node N-1 appears so torch's num_nodes = max(edge_index)+1 == N
    src = src.at[0].set(N - 1)
    dst = dst.at[0].set(0)
    edge_index = jnp.stack([src, dst], axis=0)

    fwd = jax.jit(combined_model_forward)
    out = jax.block_until_ready(fwd(x, edge_index, w))

    ref = reference_forward(x, edge_index, w)
    np.testing.assert_allclose(np.asarray(out), np.asarray(ref),
                               rtol=1e-5, atol=1e-5)

    print("KERNEL_OK")
</pallas_src>

<mosaic_0001>
module attributes {stable_mosaic.version = 11 : i64} {
  func.func @gcn_fused_kernel(%arg0: i32, %arg1: i32, %arg2: memref<256x128xf32, #tpu.memory_space<vmem>>, %arg3: memref<128x128xf32, #tpu.memory_space<vmem>>, %arg4: memref<128x128xf32, #tpu.memory_space<vmem>>, %arg5: memref<1x128xi32, #tpu.memory_space<vmem>>, %arg6: memref<256x128xf32, #tpu.memory_space<vmem>>, %arg7: memref<256x128xf32, #tpu.memory_space<vmem>>) attributes {dimension_semantics = [#tpu.dimension_semantics<parallel>, #tpu.dimension_semantics<arbitrary>], iteration_bounds = array<i64: 1, 1>, scalar_prefetch = 0 : i64, scratch_operands = 1 : i64, tpu.core_type = #tpu.core_type<tc>, window_params = [{transform_indices = @transform_0, window_bounds = array<i64: 256, 128>}, {pipeline_mode = #tpu.pipeline_mode<synchronous>, transform_indices = @transform_1, window_bounds = array<i64: 128, 128>}, {transform_indices = @transform_2, window_bounds = array<i64: 128, 128>}, {transform_indices = @transform_3, window_bounds = array<i64: 1, 128>}, {transform_indices = @transform_4, window_bounds = array<i64: 256, 128>}]} {
    %c0_i32 = arith.constant 0 : i32
    %0 = arith.cmpi eq, %arg1, %c0_i32 : i32
    %1 = arith.extui %0 : i1 to i32
    %c0_i32_0 = arith.constant 0 : i32
    %2 = arith.cmpi ne, %1, %c0_i32_0 : i32
    scf.if %2 {
      %cst_12 = arith.constant 0.000000e+00 : f32
      %21 = vector.broadcast %cst_12 : f32 to vector<256x128xf32>
      %c0_13 = arith.constant 0 : index
      %c0_14 = arith.constant 0 : index
      %22 = vector.load %arg7[%c0_13, %c0_14] : memref<256x128xf32, #tpu.memory_space<vmem>>, vector<256x128xf32>
      tpu.vector_store %arg7[%c0_13, %c0_14], %21 {strides = array<i32>} : memref<256x128xf32, #tpu.memory_space<vmem>>, vector<256x128xf32>,
    } else {
    }
    %c256_i32 = arith.constant 256 : i32
    %3 = arith.muli %arg0, %c256_i32 : i32
    %c0 = arith.constant 0 : index
    %c0_1 = arith.constant 0 : index
    %4 = vector.load %arg5[%c0, %c0_1] : memref<1x128xi32, #tpu.memory_space<vmem>>, vector<1x128xi32>
    %5 = vector.broadcast %3 : i32 to vector<1x128xi32>
    %6 = arith.subi %4, %5 : vector<1x128xi32>
    %7 = tpu.iota {dimensions = array<i32: 0>} : vector<256x128xi32>
    %8 = vector.broadcast %6 : vector<1x128xi32> to vector<256x128xi32>
    %9 = arith.cmpi eq, %8, %7 : vector<256x128xi32>
    %cst = arith.constant 1.000000e+00 : f32
    %cst_2 = arith.constant 0.000000e+00 : f32
    %10 = vector.broadcast %cst : f32 to vector<256x128xf32>
    %11 = vector.broadcast %cst_2 : f32 to vector<256x128xf32>
    %12 = arith.select %9, %10, %11 : vector<256x128xi1>, vector<256x128xf32>
    %c0_3 = arith.constant 0 : index
    %c0_4 = arith.constant 0 : index
    %13 = vector.load %arg7[%c0_3, %c0_4] : memref<256x128xf32, #tpu.memory_space<vmem>>, vector<256x128xf32>
    %c0_5 = arith.constant 0 : index
    %c0_6 = arith.constant 0 : index
    %14 = vector.load %arg4[%c0_5, %c0_6] : memref<128x128xf32, #tpu.memory_space<vmem>>, vector<128x128xf32>
    %cst_7 = arith.constant dense<0.000000e+00> : vector<256x128xf32>
    %15 = tpu.matmul %12, %14, %cst_7 {dimension_numbers = #tpu.dot_dimension_numbers<[1], [0], [0], [1], [0, 0, 1, 1], [], []>} : vector<256x128xf32>, vector<128x128xf32>, vector<256x128xf32> -> vector<256x128xf32>
    %16 = arith.addf %13, %15 : vector<256x128xf32>
    %c0_8 = arith.constant 0 : index
    %c0_9 = arith.constant 0 : index
    %17 = vector.load %arg7[%c0_8, %c0_9] : memref<256x128xf32, #tpu.memory_space<vmem>>, vector<256x128xf32>
    tpu.vector_store %arg7[%c0_8, %c0_9], %16 {strides = array<i32>} : memref<256x128xf32, #tpu.memory_space<vmem>>, vector<256x128xf32>,
    %c0_i32_10 = arith.constant 0 : i32
    %18 = arith.cmpi eq, %arg1, %c0_i32_10 : i32
    %19 = arith.extui %18 : i1 to i32
    %c0_i32_11 = arith.constant 0 : i32
    %20 = arith.cmpi ne, %19, %c0_i32_11 : i32
    scf.if %20 {
      %c0_12 = arith.constant 0 : index
      %c0_13 = arith.constant 0 : index
      %21 = vector.load %arg7[%c0_12, %c0_13] : memref<256x128xf32, #tpu.memory_space<vmem>>, vector<256x128xf32>
      %c0_14 = arith.constant 0 : index
      %c0_15 = arith.constant 0 : index
      %22 = vector.load %arg2[%c0_14, %c0_15] : memref<256x128xf32, #tpu.memory_space<vmem>>, vector<256x128xf32>
      %23 = arith.addf %21, %22 : vector<256x128xf32>
      %c0_16 = arith.constant 0 : index
      %c0_17 = arith.constant 0 : index
      %24 = vector.load %arg3[%c0_16, %c0_17] : memref<128x128xf32, #tpu.memory_space<vmem>>, vector<128x128xf32>
      %cst_18 = arith.constant dense<0.000000e+00> : vector<256x128xf32>
      %25 = tpu.matmul %23, %24, %cst_18 {dimension_numbers = #tpu.dot_dimension_numbers<[1], [0], [0], [1], [0, 0, 1, 1], [], []>} : vector<256x128xf32>, vector<128x128xf32>, vector<256x128xf32> -> vector<256x128xf32>
      %cst_19 = arith.constant 0.000000e+00 : f32
      %26 = vector.broadcast %cst_19 : f32 to vector<256x128xf32>
      %27 = arith.maximumf %25, %26 : vector<256x128xf32>
      %c0_20 = arith.constant 0 : index
      %c0_21 = arith.constant 0 : index
      %28 = vector.load %arg6[%c0_20, %c0_21] : memref<256x128xf32, #tpu.memory_space<vmem>>, vector<256x128xf32>
      tpu.vector_store %arg6[%c0_20, %c0_21], %27 {strides = array<i32>} : memref<256x128xf32, #tpu.memory_space<vmem>>, vector<256x128xf32>,
    } else {
    }
    return
  }
  func.func @transform_0(%arg0: i32, %arg1: i32) -> (i32, i32) {
    %c0_i32 = arith.constant 0 : i32
    %c0_i32_0 = arith.constant 0 : i32
    return %arg0, %c0_i32 : i32, i32
  }
  func.func @transform_1(%arg0: i32, %arg1: i32) -> (i32, i32) {
    %c0_i32 = arith.constant 0 : i32
    %c0_i32_0 = arith.constant 0 : i32
    %c0_i32_1 = arith.constant 0 : i32
    return %c0_i32, %c0_i32_0 : i32, i32
  }
  func.func @transform_2(%arg0: i32, %arg1: i32) -> (i32, i32) {
    %c0_i32 = arith.constant 0 : i32
    %c0_i32_0 = arith.constant 0 : i32
    return %arg1, %c0_i32 : i32, i32
  }
  func.func @transform_3(%arg0: i32, %arg1: i32) -> (i32, i32) {
    %c0_i32 = arith.constant 0 : i32
    %c0_i32_0 = arith.constant 0 : i32
    return %c0_i32, %arg1 : i32, i32
  }
  func.func @transform_4(%arg0: i32, %arg1: i32) -> (i32, i32) {
    %c0_i32 = arith.constant 0 : i32
    %c0_i32_0 = arith.constant 0 : i32
    return %arg0, %c0_i32 : i32, i32
  }
}

</mosaic_0001>

<llo_original>
// kernel: combined_model_forward.1
$region0: #{combined_model_forward.1}
  #allocation0 [shape = 'u32[]', space=smem, size = 0x4, offset = 0x4, fixed_abs, tag = 'smem constant byte address 0x4 - core index']
  #allocation1 [shape = 'u32[144,128]{1,0:T(1,128)}', space=vmem, size = 0x12000, scoped, tag = 'internal scratch']
  #allocation2 [shape = 'f32[256,128]{1,0:T(8,128)}', space=vmem, size = 0x20000, scoped, tag = 'scratch operand']
  %s0 = inlined_call_operand.vmem [shape: f32[256,128], index: 0, kind: input, shape index: {}]
  %s1 = inlined_call_operand.vmem [shape: f32[128,128], index: 1, kind: input, shape index: {}]
  %s2 = inlined_call_operand.vmem [shape: f32[128,128], index: 2, kind: input, shape index: {}]
  %s3 = inlined_call_operand.vmem [shape: s32[1,128], index: 3, kind: input, shape index: {}]
  %s4 = inlined_call_operand.vmem [shape: f32[256,128], index: 4, kind: output, shape index: {}]
  %s5 = sld [smem:[#allocation0]]
  $region34: #{combined_model_forward.1} parent=0
    _
  %s7 = ssub.s32 1, %s5
  %s8 = scalar_select 0, %s7, %s5
  // Predicated region
  $region2: #{combined_model_forward.1} parent=0 // pred_check
    _
  $region3: #{combined_model_forward.1} parent=0 // pred_check_branch
    %10 = sbr.rel (0) target = $region5
  $region4: #{combined_model_forward.1} parent=0 // pred_region
    _
  $region5: #{combined_model_forward.1} parent=0 // pred_fallthru
    _
  // Predicated region
  $region6: #{combined_model_forward.1} parent=0 // pred_check
    _
  $region7: #{combined_model_forward.1} parent=0 // pred_check_branch
    %12 = sbr.rel (0) target = $region9
  $region8: #{combined_model_forward.1} parent=0 // pred_region
    _
  $region9: #{combined_model_forward.1} parent=0 // pred_fallthru
    _
  // Predicated region
  $region10: #{combined_model_forward.1} parent=0 // pred_check
    _
  $region11: #{combined_model_forward.1} parent=0 // pred_check_branch
    %14 = sbr.rel (0) target = $region13
  $region12: #{combined_model_forward.1} parent=0 // pred_region
    _
  $region13: #{combined_model_forward.1} parent=0 // pred_fallthru
    _
  // Predicated region
  $region14: #{combined_model_forward.1} parent=0 // pred_check
    _
  $region15: #{combined_model_forward.1} parent=0 // pred_check_branch
    %16 = sbr.rel (0) target = $region17
  $region16: #{combined_model_forward.1} parent=0 // pred_region
    _
  $region17: #{combined_model_forward.1} parent=0 // pred_fallthru
    _
  %p17 = scmp.eq.s32.totalorder 0, 0
  // Predicated region
  $region18: #{combined_model_forward.1} parent=0 // pred_check
    %p18 = pneg %p17
  $region19: #{combined_model_forward.1} parent=0 // pred_check_branch
    %20 = sbr.rel (%p18) target = $region21
  $region20: #{combined_model_forward.1} parent=0 // pred_region
    %21 = vst [vmem:[#allocation2] sm:$0xff] 0.0
    %22 = vst [vmem:[#allocation2 + $0x8] sm:$0xff] 0.0
    %23 = vst [vmem:[#allocation2 + $0x10] sm:$0xff] 0.0
    %24 = vst [vmem:[#allocation2 + $0x18] sm:$0xff] 0.0
    %25 = vst [vmem:[#allocation2 + $0x20] sm:$0xff] 0.0
    %26 = vst [vmem:[#allocation2 + $0x28] sm:$0xff] 0.0
    %27 = vst [vmem:[#allocation2 + $0x30] sm:$0xff] 0.0
    %28 = vst [vmem:[#allocation2 + $0x38] sm:$0xff] 0.0
    %29 = vst [vmem:[#allocation2 + $0x40] sm:$0xff] 0.0
    %30 = vst [vmem:[#allocation2 + $0x48] sm:$0xff] 0.0
    %31 = vst [vmem:[#allocation2 + $0x50] sm:$0xff] 0.0
    %32 = vst [vmem:[#allocation2 + $0x58] sm:$0xff] 0.0
    %33 = vst [vmem:[#allocation2 + $0x60] sm:$0xff] 0.0
    %34 = vst [vmem:[#allocation2 + $0x68] sm:$0xff] 0.0
    %35 = vst [vmem:[#allocation2 + $0x70] sm:$0xff] 0.0
    %36 = vst [vmem:[#allocation2 + $0x78] sm:$0xff] 0.0
    %37 = vst [vmem:[#allocation2 + $0x80] sm:$0xff] 0.0
    %38 = vst [vmem:[#allocation2 + $0x88] sm:$0xff] 0.0
    %39 = vst [vmem:[#allocation2 + $0x90] sm:$0xff] 0.0
    %40 = vst [vmem:[#allocation2 + $0x98] sm:$0xff] 0.0
    %41 = vst [vmem:[#allocation2 + $0xa0] sm:$0xff] 0.0
    %42 = vst [vmem:[#allocation2 + $0xa8] sm:$0xff] 0.0
    %43 = vst [vmem:[#allocation2 + $0xb0] sm:$0xff] 0.0
    %44 = vst [vmem:[#allocation2 + $0xb8] sm:$0xff] 0.0
    %45 = vst [vmem:[#allocation2 + $0xc0] sm:$0xff] 0.0
    %46 = vst [vmem:[#allocation2 + $0xc8] sm:$0xff] 0.0
    %47 = vst [vmem:[#allocation2 + $0xd0] sm:$0xff] 0.0
    %48 = vst [vmem:[#allocation2 + $0xd8] sm:$0xff] 0.0
    %49 = vst [vmem:[#allocation2 + $0xe0] sm:$0xff] 0.0
    %50 = vst [vmem:[#allocation2 + $0xe8] sm:$0xff] 0.0
    %51 = vst [vmem:[#allocation2 + $0xf0] sm:$0xff] 0.0
    %52 = vst [vmem:[#allocation2 + $0xf8] sm:$0xff] 0.0
  $region21: #{combined_model_forward.1} parent=0 // pred_fallthru
    _
  %s53 = smul.u32 0, 256
  %v54 = vld [vmem:[%s3] sm:$0x1]
  %v55 = vstv %s53
  %v56 = vsub.s32 %v54, %v55
  %v57 = vlaneseq
  %v58 = vshrl.u32 %v57, 7
  %v59 = vadd.s32 %v58, 8
  %v60 = vadd.s32 %v58, 16
  %v61 = vadd.s32 %v58, 24
  %v62 = vadd.s32 %v58, 32
  %v63 = vadd.s32 %v58, 40
  %v64 = vadd.s32 %v58, 48
  %v65 = vadd.s32 %v58, 56
  %v66 = vadd.s32 %v58, 64
  %v67 = vadd.s32 %v58, 72
  %v68 = vadd.s32 %v58, 80
  %v69 = vadd.s32 %v58, 88
  %v70 = vadd.s32 %v58, 96
  %v71 = vadd.s32 %v58, 104
  %v72 = vadd.s32 %v58, 112
  %v73 = vadd.s32 %v58, 120
  %v74 = vadd.s32 %v58, 128
  %v75 = vadd.s32 %v58, 136
  %v76 = vadd.s32 %v58, 144
  %v77 = vadd.s32 %v58, 152
  %v78 = vadd.s32 %v58, 160
  %v79 = vadd.s32 %v58, 168
  %v80 = vadd.s32 %v58, 176
  %v81 = vadd.s32 %v58, 184
  %v82 = vadd.s32 %v58, 192
  %v83 = vadd.s32 %v58, 200
  %v84 = vadd.s32 %v58, 208
  %v85 = vadd.s32 %v58, 216
  %v86 = vadd.s32 %v58, 224
  %v87 = vadd.s32 %v58, 232
  %v88 = vadd.s32 %v58, 240
  %v89 = vadd.s32 %v58, 248
  %v90 = vlaneseq
  %v91 = vshrl.u32 %v90, 7
  %v92 = vsub.s32 0, %v91
  %v93 = vrot.slane %v56, %v92
  %vm94 = vcmp.eq.s32.totalorder %v93, %v58
  %vm95 = vcmp.eq.s32.totalorder %v93, %v59
  %vm96 = vcmp.eq.s32.totalorder %v93, %v60
  %vm97 = vcmp.eq.s32.totalorder %v93, %v61
  %vm98 = vcmp.eq.s32.totalorder %v93, %v62
  %vm99 = vcmp.eq.s32.totalorder %v93, %v63
  %vm100 = vcmp.eq.s32.totalorder %v93, %v64
  %vm101 = vcmp.eq.s32.totalorder %v93, %v65
  %vm102 = vcmp.eq.s32.totalorder %v93, %v66
  %vm103 = vcmp.eq.s32.totalorder %v93, %v67
  %vm104 = vcmp.eq.s32.totalorder %v93, %v68
  %vm105 = vcmp.eq.s32.totalorder %v93, %v69
  %vm106 = vcmp.eq.s32.totalorder %v93, %v70
  %vm107 = vcmp.eq.s32.totalorder %v93, %v71
  %vm108 = vcmp.eq.s32.totalorder %v93, %v72
  %vm109 = vcmp.eq.s32.totalorder %v93, %v73
  %vm110 = vcmp.eq.s32.totalorder %v93, %v74
  %vm111 = vcmp.eq.s32.totalorder %v93, %v75
  %vm112 = vcmp.eq.s32.totalorder %v93, %v76
  %vm113 = vcmp.eq.s32.totalorder %v93, %v77
  %vm114 = vcmp.eq.s32.totalorder %v93, %v78
  %vm115 = vcmp.eq.s32.totalorder %v93, %v79
  %vm116 = vcmp.eq.s32.totalorder %v93, %v80
  %vm117 = vcmp.eq.s32.totalorder %v93, %v81
  %vm118 = vcmp.eq.s32.totalorder %v93, %v82
  %vm119 = vcmp.eq.s32.totalorder %v93, %v83
  %vm120 = vcmp.eq.s32.totalorder %v93, %v84
  %vm121 = vcmp.eq.s32.totalorder %v93, %v85
  %vm122 = vcmp.eq.s32.totalorder %v93, %v86
  %vm123 = vcmp.eq.s32.totalorder %v93, %v87
  %vm124 = vcmp.eq.s32.totalorder %v93, %v88
  %vm125 = vcmp.eq.s32.totalorder %v93, %v89
  %v126 = vsel %vm94, 1.0, 0.0
  %v127 = vsel %vm95, 1.0, 0.0
  %v128 = vsel %vm96, 1.0, 0.0
  %v129 = vsel %vm97, 1.0, 0.0
  %v130 = vsel %vm98, 1.0, 0.0
  %v131 = vsel %vm99, 1.0, 0.0
  %v132 = vsel %vm100, 1.0, 0.0
  %v133 = vsel %vm101, 1.0, 0.0
  %v134 = vsel %vm102, 1.0, 0.0
  %v135 = vsel %vm103, 1.0, 0.0
  %v136 = vsel %vm104, 1.0, 0.0
  %v137 = vsel %vm105, 1.0, 0.0
  %v138 = vsel %vm106, 1.0, 0.0
  %v139 = vsel %vm107, 1.0, 0.0
  %v140 = vsel %vm108, 1.0, 0.0
  %v141 = vsel %vm109, 1.0, 0.0
  %v142 = vsel %vm110, 1.0, 0.0
  %v143 = vsel %vm111, 1.0, 0.0
  %v144 = vsel %vm112, 1.0, 0.0
  %v145 = vsel %vm113, 1.0, 0.0
  %v146 = vsel %vm114, 1.0, 0.0
  %v147 = vsel %vm115, 1.0, 0.0
  %v148 = vsel %vm116, 1.0, 0.0
  %v149 = vsel %vm117, 1.0, 0.0
  %v150 = vsel %vm118, 1.0, 0.0
  %v151 = vsel %vm119, 1.0, 0.0
  %v152 = vsel %vm120, 1.0, 0.0
  %v153 = vsel %vm121, 1.0, 0.0
  %v154 = vsel %vm122, 1.0, 0.0
  %v155 = vsel %vm123, 1.0, 0.0
  %v156 = vsel %vm124, 1.0, 0.0
  %v157 = vsel %vm125, 1.0, 0.0
  %v158 = vld [vmem:[#allocation2] sm:$0xff]
  %v159 = vld [vmem:[#allocation2 + $0x8] sm:$0xff]
  %v160 = vld [vmem:[#allocation2 + $0x10] sm:$0xff]
  %v161 = vld [vmem:[#allocation2 + $0x18] sm:$0xff]
  %v162 = vld [vmem:[#allocation2 + $0x20] sm:$0xff]
  %v163 = vld [vmem:[#allocation2 + $0x28] sm:$0xff]
  %v164 = vld [vmem:[#allocation2 + $0x30] sm:$0xff]
  %v165 = vld [vmem:[#allocation2 + $0x38] sm:$0xff]
  %v166 = vld [vmem:[#allocation2 + $0x40] sm:$0xff]
  %v167 = vld [vmem:[#allocation2 + $0x48] sm:$0xff]
  %v168 = vld [vmem:[#allocation2 + $0x50] sm:$0xff]
  %v169 = vld [vmem:[#allocation2 + $0x58] sm:$0xff]
  %v170 = vld [vmem:[#allocation2 + $0x60] sm:$0xff]
  %v171 = vld [vmem:[#allocation2 + $0x68] sm:$0xff]
  %v172 = vld [vmem:[#allocation2 + $0x70] sm:$0xff]
  %v173 = vld [vmem:[#allocation2 + $0x78] sm:$0xff]
  %v174 = vld [vmem:[#allocation2 + $0x80] sm:$0xff]
  %v175 = vld [vmem:[#allocation2 + $0x88] sm:$0xff]
  %v176 = vld [vmem:[#allocation2 + $0x90] sm:$0xff]
  %v177 = vld [vmem:[#allocation2 + $0x98] sm:$0xff]
  %v178 = vld [vmem:[#allocation2 + $0xa0] sm:$0xff]
  %v179 = vld [vmem:[#allocation2 + $0xa8] sm:$0xff]
  %v180 = vld [vmem:[#allocation2 + $0xb0] sm:$0xff]
  %v181 = vld [vmem:[#allocation2 + $0xb8] sm:$0xff]
  %v182 = vld [vmem:[#allocation2 + $0xc0] sm:$0xff]
  %v183 = vld [vmem:[#allocation2 + $0xc8] sm:$0xff]
  %v184 = vld [vmem:[#allocation2 + $0xd0] sm:$0xff]
  %v185 = vld [vmem:[#allocation2 + $0xd8] sm:$0xff]
  %v186 = vld [vmem:[#allocation2 + $0xe0] sm:$0xff]
  %v187 = vld [vmem:[#allocation2 + $0xe8] sm:$0xff]
  %v188 = vld [vmem:[#allocation2 + $0xf0] sm:$0xff]
  %v189 = vld [vmem:[#allocation2 + $0xf8] sm:$0xff]
  %v190 = vld [vmem:[%s2] sm:$0xff]
  %v191 = vld [vmem:[%s2 + $0x8] sm:$0xff]
  %v192 = vld [vmem:[%s2 + $0x10] sm:$0xff]
  %v193 = vld [vmem:[%s2 + $0x18] sm:$0xff]
  %v194 = vld [vmem:[%s2 + $0x20] sm:$0xff]
  %v195 = vld [vmem:[%s2 + $0x28] sm:$0xff]
  %v196 = vld [vmem:[%s2 + $0x30] sm:$0xff]
  %v197 = vld [vmem:[%s2 + $0x38] sm:$0xff]
  %v198 = vld [vmem:[%s2 + $0x40] sm:$0xff]
  %v199 = vld [vmem:[%s2 + $0x48] sm:$0xff]
  %v200 = vld [vmem:[%s2 + $0x50] sm:$0xff]
  %v201 = vld [vmem:[%s2 + $0x58] sm:$0xff]
  %v202 = vld [vmem:[%s2 + $0x60] sm:$0xff]
  %v203 = vld [vmem:[%s2 + $0x68] sm:$0xff]
  %v204 = vld [vmem:[%s2 + $0x70] sm:$0xff]
  %v205 = vld [vmem:[%s2 + $0x78] sm:$0xff]
  %206 = vmatprep.subr.mxu0 0.0
  %207 = vmatpush1.msra.mxu0 %v190
  %208 = vmatprep.subr.mxu0 0.0
  %209 = vmatpush1.msra.mxu0 %v191
  %210 = vmatprep.subr.mxu0 0.0
  %211 = vmatpush1.msra.mxu0 %v192
  %212 = vmatprep.subr.mxu0 0.0
  %213 = vmatpush1.msra.mxu0 %v193
  %214 = vmatprep.subr.mxu0 0.0
  %215 = vmatpush1.msra.mxu0 %v194
  %216 = vmatprep.subr.mxu0 0.0
  %217 = vmatpush1.msra.mxu0 %v195
  %218 = vmatprep.subr.mxu0 0.0
  %219 = vmatpush1.msra.mxu0 %v196
  %220 = vmatprep.subr.mxu0 0.0
  %221 = vmatpush1.msra.mxu0 %v197
  %222 = vmatprep.subr.mxu0 0.0
  %223 = vmatpush1.msra.mxu0 %v198
  %224 = vmatprep.subr.mxu0 0.0
  %225 = vmatpush1.msra.mxu0 %v199
  %226 = vmatprep.subr.mxu0 0.0
  %227 = vmatpush1.msra.mxu0 %v200
  %228 = vmatprep.subr.mxu0 0.0
  %229 = vmatpush1.msra.mxu0 %v201
  %230 = vmatprep.subr.mxu0 0.0
  %231 = vmatpush1.msra.mxu0 %v202
  %232 = vmatprep.subr.mxu0 0.0
  %233 = vmatpush1.msra.mxu0 %v203
  %234 = vmatprep.subr.mxu0 0.0
  %235 = vmatpush1.msra.mxu0 %v204
  %236 = vmatprep.subr.mxu0 0.0
  %237 = vmatpush1.msra.mxu0 %v205
  %238 = vmatprep.subr.mxu0 0.0
  %239 = vmatpush1.msra.mxu0 0.0
  %240 = vmatprep.subr.mxu0 0.0
  %241 = vmatpush1.msra.mxu0 0.0
  %242 = vmatprep.subr.mxu0 0.0
  %243 = vmatpush1.msra.mxu0 0.0
  %244 = vmatprep.subr.mxu0 0.0
  %245 = vmatpush1.msra.mxu0 0.0
  %246 = vmatprep.subr.mxu0 0.0
  %247 = vmatpush1.msra.mxu0 0.0
  %248 = vmatprep.subr.mxu0 0.0
  %249 = vmatpush1.msra.mxu0 0.0
  %250 = vmatprep.subr.mxu0 0.0
  %251 = vmatpush1.msra.mxu0 0.0
  %252 = vmatprep.subr.mxu0 0.0
  %253 = vmatpush1.msra.mxu0 0.0
  %254 = vmatprep.subr.mxu0 0.0
  %255 = vmatpush1.msra.mxu0 0.0
  %256 = vmatprep.subr.mxu0 0.0
  %257 = vmatpush1.msra.mxu0 0.0
  %258 = vmatprep.subr.mxu0 0.0
  %259 = vmatpush1.msra.mxu0 0.0
  %260 = vmatprep.subr.mxu0 0.0
  %261 = vmatpush1.msra.mxu0 0.0
  %262 = vmatprep.subr.mxu0 0.0
  %263 = vmatpush1.msra.mxu0 0.0
  %264 = vmatprep.subr.mxu0 0.0
  %265 = vmatpush1.msra.mxu0 0.0
  %266 = vmatprep.subr.mxu0 0.0
  %267 = vmatpush1.msra.mxu0 0.0
  %268 = vmatprep.subr.mxu0 0.0
  %269 = vmatpush1.msra.mxu0 0.0
  %270 = vmatprep.mubr.f32.mxu0 0.0
  %271 = vmatmul.mubr.f32.gmra.mrb[0].mxu0 %v126
  %v272 = vpop.f32.mrb[0].mxu0
  %v273 = vadd.f32 0.0, %v272
  %v274 = vpop.f32.mrb[0].mxu0
  %275 = vmatprep.mubr.f32.mxu0 0.0
  %276 = vmatmul.mubr.f32.gmra.mrb[0].mxu0 %v127
  %v277 = vpop.f32.mrb[0].mxu0
  %v278 = vadd.f32 0.0, %v277
  %v279 = vpop.f32.mrb[0].mxu0
  %280 = vmatprep.mubr.f32.mxu0 0.0
  %281 = vmatmul.mubr.f32.gmra.mrb[0].mxu0 %v128
  %v282 = vpop.f32.mrb[0].mxu0
  %v283 = vadd.f32 0.0, %v282
  %v284 = vpop.f32.mrb[0].mxu0
  %285 = vmatprep.mubr.f32.mxu0 0.0
  %286 = vmatmul.mubr.f32.gmra.mrb[0].mxu0 %v129
  %v287 = vpop.f32.mrb[0].mxu0
  %v288 = vadd.f32 0.0, %v287
  %v289 = vpop.f32.mrb[0].mxu0
  %290 = vmatprep.mubr.f32.mxu0 0.0
  %291 = vmatmul.mubr.f32.gmra.mrb[0].mxu0 %v130
  %v292 = vpop.f32.mrb[0].mxu0
  %v293 = vadd.f32 0.0, %v292
  %v294 = vpop.f32.mrb[0].mxu0
  %295 = vmatprep.mubr.f32.mxu0 0.0
  %296 = vmatmul.mubr.f32.gmra.mrb[0].mxu0 %v131
  %v297 = vpop.f32.mrb[0].mxu0
  %v298 = vadd.f32 0.0, %v297
  %v299 = vpop.f32.mrb[0].mxu0
  %300 = vmatprep.mubr.f32.mxu0 0.0
  %301 = vmatmul.mubr.f32.gmra.mrb[0].mxu0 %v132
  %v302 = vpop.f32.mrb[0].mxu0
  %v303 = vadd.f32 0.0, %v302
  %v304 = vpop.f32.mrb[0].mxu0
  %305 = vmatprep.mubr.f32.mxu0 0.0
  %306 = vmatmul.mubr.f32.gmra.mrb[0].mxu0 %v133
  %v307 = vpop.f32.mrb[0].mxu0
  %v308 = vadd.f32 0.0, %v307
  %v309 = vpop.f32.mrb[0].mxu0
  %310 = vmatprep.mubr.f32.mxu0 0.0
  %311 = vmatmul.mubr.f32.gmra.mrb[0].mxu0 %v134
  %v312 = vpop.f32.mrb[0].mxu0
  %v313 = vadd.f32 0.0, %v312
  %v314 = vpop.f32.mrb[0].mxu0
  %315 = vmatprep.mubr.f32.mxu0 0.0
  %316 = vmatmul.mubr.f32.gmra.mrb[0].mxu0 %v135
  %v317 = vpop.f32.mrb[0].mxu0
  %v318 = vadd.f32 0.0, %v317
  %v319 = vpop.f32.mrb[0].mxu0
  %320 = vmatprep.mubr.f32.mxu0 0.0
  %321 = vmatmul.mubr.f32.gmra.mrb[0].mxu0 %v136
  %v322 = vpop.f32.mrb[0].mxu0
  %v323 = vadd.f32 0.0, %v322
  %v324 = vpop.f32.mrb[0].mxu0
  %325 = vmatprep.mubr.f32.mxu0 0.0
  %326 = vmatmul.mubr.f32.gmra.mrb[0].mxu0 %v137
  %v327 = vpop.f32.mrb[0].mxu0
  %v328 = vadd.f32 0.0, %v327
  %v329 = vpop.f32.mrb[0].mxu0
  %330 = vmatprep.mubr.f32.mxu0 0.0
  %331 = vmatmul.mubr.f32.gmra.mrb[0].mxu0 %v138
  %v332 = vpop.f32.mrb[0].mxu0
  %v333 = vadd.f32 0.0, %v332
  %v334 = vpop.f32.mrb[0].mxu0
  %335 = vmatprep.mubr.f32.mxu0 0.0
  %336 = vmatmul.mubr.f32.gmra.mrb[0].mxu0 %v139
  %v337 = vpop.f32.mrb[0].mxu0
  %v338 = vadd.f32 0.0, %v337
  %v339 = vpop.f32.mrb[0].mxu0
  %340 = vmatprep.mubr.f32.mxu0 0.0
  %341 = vmatmul.mubr.f32.gmra.mrb[0].mxu0 %v140
  %v342 = vpop.f32.mrb[0].mxu0
  %v343 = vadd.f32 0.0, %v342
  %v344 = vpop.f32.mrb[0].mxu0
  %345 = vmatprep.mubr.f32.mxu0 0.0
  %346 = vmatmul.mubr.f32.gmra.mrb[0].mxu0 %v141
  %v347 = vpop.f32.mrb[0].mxu0
  %v348 = vadd.f32 0.0, %v347
  %v349 = vpop.f32.mrb[0].mxu0
  %350 = vmatprep.mubr.f32.mxu0 0.0
  %351 = vmatmul.mubr.f32.gmra.mrb[0].mxu0 %v142
  %v352 = vpop.f32.mrb[0].mxu0
  %v353 = vadd.f32 0.0, %v352
  %v354 = vpop.f32.mrb[0].mxu0
  %355 = vmatprep.mubr.f32.mxu0 0.0
  %356 = vmatmul.mubr.f32.gmra.mrb[0].mxu0 %v143
  %v357 = vpop.f32.mrb[0].mxu0
  %v358 = vadd.f32 0.0, %v357
  %v359 = vpop.f32.mrb[0].mxu0
  %360 = vmatprep.mubr.f32.mxu0 0.0
  %361 = vmatmul.mubr.f32.gmra.mrb[0].mxu0 %v144
  %v362 = vpop.f32.mrb[0].mxu0
  %v363 = vadd.f32 0.0, %v362
  %v364 = vpop.f32.mrb[0].mxu0
  %365 = vmatprep.mubr.f32.mxu0 0.0
  %366 = vmatmul.mubr.f32.gmra.mrb[0].mxu0 %v145
  %v367 = vpop.f32.mrb[0].mxu0
  %v368 = vadd.f32 0.0, %v367
  %v369 = vpop.f32.mrb[0].mxu0
  %370 = vmatprep.mubr.f32.mxu0 0.0
  %371 = vmatmul.mubr.f32.gmra.mrb[0].mxu0 %v146
  %v372 = vpop.f32.mrb[0].mxu0
  %v373 = vadd.f32 0.0, %v372
  %v374 = vpop.f32.mrb[0].mxu0
  %375 = vmatprep.mubr.f32.mxu0 0.0
  %376 = vmatmul.mubr.f32.gmra.mrb[0].mxu0 %v147
  %v377 = vpop.f32.mrb[0].mxu0
  %v378 = vadd.f32 0.0, %v377
  %v379 = vpop.f32.mrb[0].mxu0
  %380 = vmatprep.mubr.f32.mxu0 0.0
  %381 = vmatmul.mubr.f32.gmra.mrb[0].mxu0 %v148
  %v382 = vpop.f32.mrb[0].mxu0
  %v383 = vadd.f32 0.0, %v382
  %v384 = vpop.f32.mrb[0].mxu0
  %385 = vmatprep.mubr.f32.mxu0 0.0
  %386 = vmatmul.mubr.f32.gmra.mrb[0].mxu0 %v149
  %v387 = vpop.f32.mrb[0].mxu0
  %v388 = vadd.f32 0.0, %v387
  %v389 = vpop.f32.mrb[0].mxu0
  %390 = vmatprep.mubr.f32.mxu0 0.0
  %391 = vmatmul.mubr.f32.gmra.mrb[0].mxu0 %v150
  %v392 = vpop.f32.mrb[0].mxu0
  %v393 = vadd.f32 0.0, %v392
  %v394 = vpop.f32.mrb[0].mxu0
  %395 = vmatprep.mubr.f32.mxu0 0.0
  %396 = vmatmul.mubr.f32.gmra.mrb[0].mxu0 %v151
  %v397 = vpop.f32.mrb[0].mxu0
  %v398 = vadd.f32 0.0, %v397
  %v399 = vpop.f32.mrb[0].mxu0
  %400 = vmatprep.mubr.f32.mxu0 0.0
  %401 = vmatmul.mubr.f32.gmra.mrb[0].mxu0 %v152
  %v402 = vpop.f32.mrb[0].mxu0
  %v403 = vadd.f32 0.0, %v402
  %v404 = vpop.f32.mrb[0].mxu0
  %405 = vmatprep.mubr.f32.mxu0 0.0
  %406 = vmatmul.mubr.f32.gmra.mrb[0].mxu0 %v153
  %v407 = vpop.f32.mrb[0].mxu0
  %v408 = vadd.f32 0.0, %v407
  %v409 = vpop.f32.mrb[0].mxu0
  %410 = vmatprep.mubr.f32.mxu0 0.0
  %411 = vmatmul.mubr.f32.gmra.mrb[0].mxu0 %v154
  %v412 = vpop.f32.mrb[0].mxu0
  %v413 = vadd.f32 0.0, %v412
  %v414 = vpop.f32.mrb[0].mxu0
  %415 = vmatprep.mubr.f32.mxu0 0.0
  %416 = vmatmul.mubr.f32.gmra.mrb[0].mxu0 %v155
  %v417 = vpop.f32.mrb[0].mxu0
  %v418 = vadd.f32 0.0, %v417
  %v419 = vpop.f32.mrb[0].mxu0
  %420 = vmatprep.mubr.f32.mxu0 0.0
  %421 = vmatmul.mubr.f32.gmra.mrb[0].mxu0 %v156
  %v422 = vpop.f32.mrb[0].mxu0
  %v423 = vadd.f32 0.0, %v422
  %v424 = vpop.f32.mrb[0].mxu0
  %425 = vmatprep.mubr.f32.mxu0 0.0
  %426 = vmatmul.mubr.f32.gmra.mrb[0].mxu0 %v157
  %v427 = vpop.f32.mrb[0].mxu0
  %v428 = vadd.f32 0.0, %v427
  %v429 = vpop.f32.mrb[0].mxu0
  %430 = vdwg.mxu0
  %v431 = vadd.f32 %v158, %v273
  %v432 = vadd.f32 %v159, %v278
  %v433 = vadd.f32 %v160, %v283
  %v434 = vadd.f32 %v161, %v288
  %v435 = vadd.f32 %v162, %v293
  %v436 = vadd.f32 %v163, %v298
  %v437 = vadd.f32 %v164, %v303
  %v438 = vadd.f32 %v165, %v308
  %v439 = vadd.f32 %v166, %v313
  %v440 = vadd.f32 %v167, %v318
  %v441 = vadd.f32 %v168, %v323
  %v442 = vadd.f32 %v169, %v328
  %v443 = vadd.f32 %v170, %v333
  %v444 = vadd.f32 %v171, %v338
  %v445 = vadd.f32 %v172, %v343
  %v446 = vadd.f32 %v173, %v348
  %v447 = vadd.f32 %v174, %v353
  %v448 = vadd.f32 %v175, %v358
  %v449 = vadd.f32 %v176, %v363
  %v450 = vadd.f32 %v177, %v368
  %v451 = vadd.f32 %v178, %v373
  %v452 = vadd.f32 %v179, %v378
  %v453 = vadd.f32 %v180, %v383
  %v454 = vadd.f32 %v181, %v388
  %v455 = vadd.f32 %v182, %v393
  %v456 = vadd.f32 %v183, %v398
  %v457 = vadd.f32 %v184, %v403
  %v458 = vadd.f32 %v185, %v408
  %v459 = vadd.f32 %v186, %v413
  %v460 = vadd.f32 %v187, %v418
  %v461 = vadd.f32 %v188, %v423
  %v462 = vadd.f32 %v189, %v428
  %463 = vst [vmem:[#allocation2] sm:$0xff] %v431
  %464 = vst [vmem:[#allocation2 + $0x8] sm:$0xff] %v432
  %465 = vst [vmem:[#allocation2 + $0x10] sm:$0xff] %v433
  %466 = vst [vmem:[#allocation2 + $0x18] sm:$0xff] %v434
  %467 = vst [vmem:[#allocation2 + $0x20] sm:$0xff] %v435
  %468 = vst [vmem:[#allocation2 + $0x28] sm:$0xff] %v436
  %469 = vst [vmem:[#allocation2 + $0x30] sm:$0xff] %v437
  %470 = vst [vmem:[#allocation2 + $0x38] sm:$0xff] %v438
  %471 = vst [vmem:[#allocation2 + $0x40] sm:$0xff] %v439
  %472 = vst [vmem:[#allocation2 + $0x48] sm:$0xff] %v440
  %473 = vst [vmem:[#allocation2 + $0x50] sm:$0xff] %v441
  %474 = vst [vmem:[#allocation2 + $0x58] sm:$0xff] %v442
  %475 = vst [vmem:[#allocation2 + $0x60] sm:$0xff] %v443
  %476 = vst [vmem:[#allocation2 + $0x68] sm:$0xff] %v444
  %477 = vst [vmem:[#allocation2 + $0x70] sm:$0xff] %v445
  %478 = vst [vmem:[#allocation2 + $0x78] sm:$0xff] %v446
  %479 = vst [vmem:[#allocation2 + $0x80] sm:$0xff] %v447
  %480 = vst [vmem:[#allocation2 + $0x88] sm:$0xff] %v448
  %481 = vst [vmem:[#allocation2 + $0x90] sm:$0xff] %v449
  %482 = vst [vmem:[#allocation2 + $0x98] sm:$0xff] %v450
  %483 = vst [vmem:[#allocation2 + $0xa0] sm:$0xff] %v451
  %484 = vst [vmem:[#allocation2 + $0xa8] sm:$0xff] %v452
  %485 = vst [vmem:[#allocation2 + $0xb0] sm:$0xff] %v453
  %486 = vst [vmem:[#allocation2 + $0xb8] sm:$0xff] %v454
  %487 = vst [vmem:[#allocation2 + $0xc0] sm:$0xff] %v455
  %488 = vst [vmem:[#allocation2 + $0xc8] sm:$0xff] %v456
  %489 = vst [vmem:[#allocation2 + $0xd0] sm:$0xff] %v457
  %490 = vst [vmem:[#allocation2 + $0xd8] sm:$0xff] %v458
  %491 = vst [vmem:[#allocation2 + $0xe0] sm:$0xff] %v459
  %492 = vst [vmem:[#allocation2 + $0xe8] sm:$0xff] %v460
  %493 = vst [vmem:[#allocation2 + $0xf0] sm:$0xff] %v461
  %494 = vst [vmem:[#allocation2 + $0xf8] sm:$0xff] %v462
  // Predicated region
  $region22: #{combined_model_forward.1} parent=0 // pred_check
    %p495 = pneg %p17
  $region23: #{combined_model_forward.1} parent=0 // pred_check_branch
    %497 = sbr.rel (%p495) target = $region25
  $region24: #{combined_model_forward.1} parent=0 // pred_region
    %v498 = vld [vmem:[#allocation2] sm:$0xff]
    %v499 = vld [vmem:[#allocation2 + $0x8] sm:$0xff]
    %v500 = vld [vmem:[#allocation2 + $0x10] sm:$0xff]
    %v501 = vld [vmem:[#allocation2 + $0x18] sm:$0xff]
    %v502 = vld [vmem:[#allocation2 + $0x20] sm:$0xff]
    %v503 = vld [vmem:[#allocation2 + $0x28] sm:$0xff]
    %v504 = vld [vmem:[#allocation2 + $0x30] sm:$0xff]
    %v505 = vld [vmem:[#allocation2 + $0x38] sm:$0xff]
    %v506 = vld [vmem:[#allocation2 + $0x40] sm:$0xff]
    %v507 = vld [vmem:[#allocation2 + $0x48] sm:$0xff]
    %v508 = vld [vmem:[#allocation2 + $0x50] sm:$0xff]
    %v509 = vld [vmem:[#allocation2 + $0x58] sm:$0xff]
    %v510 = vld [vmem:[#allocation2 + $0x60] sm:$0xff]
    %v511 = vld [vmem:[#allocation2 + $0x68] sm:$0xff]
    %v512 = vld [vmem:[#allocation2 + $0x70] sm:$0xff]
    %v513 = vld [vmem:[#allocation2 + $0x78] sm:$0xff]
    %v514 = vld [vmem:[#allocation2 + $0x80] sm:$0xff]
    %v515 = vld [vmem:[#allocation2 + $0x88] sm:$0xff]
    %v516 = vld [vmem:[#allocation2 + $0x90] sm:$0xff]
    %v517 = vld [vmem:[#allocation2 + $0x98] sm:$0xff]
    %v518 = vld [vmem:[#allocation2 + $0xa0] sm:$0xff]
    %v519 = vld [vmem:[#allocation2 + $0xa8] sm:$0xff]
    %v520 = vld [vmem:[#allocation2 + $0xb0] sm:$0xff]
    %v521 = vld [vmem:[#allocation2 + $0xb8] sm:$0xff]
    %v522 = vld [vmem:[#allocation2 + $0xc0] sm:$0xff]
    %v523 = vld [vmem:[#allocation2 + $0xc8] sm:$0xff]
    %v524 = vld [vmem:[#allocation2 + $0xd0] sm:$0xff]
    %v525 = vld [vmem:[#allocation2 + $0xd8] sm:$0xff]
    %v526 = vld [vmem:[#allocation2 + $0xe0] sm:$0xff]
    %v527 = vld [vmem:[#allocation2 + $0xe8] sm:$0xff]
    %v528 = vld [vmem:[#allocation2 + $0xf0] sm:$0xff]
    %v529 = vld [vmem:[#allocation2 + $0xf8] sm:$0xff]
    %v530 = vld [vmem:[%s0] sm:$0xff]
    %v531 = vld [vmem:[%s0 + $0x8] sm:$0xff]
    %v532 = vld [vmem:[%s0 + $0x10] sm:$0xff]
    %v533 = vld [vmem:[%s0 + $0x18] sm:$0xff]
    %v534 = vld [vmem:[%s0 + $0x20] sm:$0xff]
    %v535 = vld [vmem:[%s0 + $0x28] sm:$0xff]
    %v536 = vld [vmem:[%s0 + $0x30] sm:$0xff]
    %v537 = vld [vmem:[%s0 + $0x38] sm:$0xff]
    %v538 = vld [vmem:[%s0 + $0x40] sm:$0xff]
    %v539 = vld [vmem:[%s0 + $0x48] sm:$0xff]
    %v540 = vld [vmem:[%s0 + $0x50] sm:$0xff]
    %v541 = vld [vmem:[%s0 + $0x58] sm:$0xff]
    %v542 = vld [vmem:[%s0 + $0x60] sm:$0xff]
    %v543 = vld [vmem:[%s0 + $0x68] sm:$0xff]
    %v544 = vld [vmem:[%s0 + $0x70] sm:$0xff]
    %v545 = vld [vmem:[%s0 + $0x78] sm:$0xff]
    %v546 = vld [vmem:[%s0 + $0x80] sm:$0xff]
    %v547 = vld [vmem:[%s0 + $0x88] sm:$0xff]
    %v548 = vld [vmem:[%s0 + $0x90] sm:$0xff]
    %v549 = vld [vmem:[%s0 + $0x98] sm:$0xff]
    %v550 = vld [vmem:[%s0 + $0xa0] sm:$0xff]
    %v551 = vld [vmem:[%s0 + $0xa8] sm:$0xff]
    %v552 = vld [vmem:[%s0 + $0xb0] sm:$0xff]
    %v553 = vld [vmem:[%s0 + $0xb8] sm:$0xff]
    %v554 = vld [vmem:[%s0 + $0xc0] sm:$0xff]
    %v555 = vld [vmem:[%s0 + $0xc8] sm:$0xff]
    %v556 = vld [vmem:[%s0 + $0xd0] sm:$0xff]
    %v557 = vld [vmem:[%s0 + $0xd8] sm:$0xff]
    %v558 = vld [vmem:[%s0 + $0xe0] sm:$0xff]
    %v559 = vld [vmem:[%s0 + $0xe8] sm:$0xff]
    %v560 = vld [vmem:[%s0 + $0xf0] sm:$0xff]
    %v561 = vld [vmem:[%s0 + $0xf8] sm:$0xff]
    %v562 = vadd.f32 %v498, %v530
    %v563 = vadd.f32 %v499, %v531
    %v564 = vadd.f32 %v500, %v532
    %v565 = vadd.f32 %v501, %v533
    %v566 = vadd.f32 %v502, %v534
    %v567 = vadd.f32 %v503, %v535
    %v568 = vadd.f32 %v504, %v536
    %v569 = vadd.f32 %v505, %v537
    %v570 = vadd.f32 %v506, %v538
    %v571 = vadd.f32 %v507, %v539
    %v572 = vadd.f32 %v508, %v540
    %v573 = vadd.f32 %v509, %v541
    %v574 = vadd.f32 %v510, %v542
    %v575 = vadd.f32 %v511, %v543
    %v576 = vadd.f32 %v512, %v544
    %v577 = vadd.f32 %v513, %v545
    %v578 = vadd.f32 %v514, %v546
    %v579 = vadd.f32 %v515, %v547
    %v580 = vadd.f32 %v516, %v548
    %v581 = vadd.f32 %v517, %v549
    %v582 = vadd.f32 %v518, %v550
    %v583 = vadd.f32 %v519, %v551
    %v584 = vadd.f32 %v520, %v552
    %v585 = vadd.f32 %v521, %v553
    %v586 = vadd.f32 %v522, %v554
    %v587 = vadd.f32 %v523, %v555
    %v588 = vadd.f32 %v524, %v556
    %v589 = vadd.f32 %v525, %v557
    %v590 = vadd.f32 %v526, %v558
    %v591 = vadd.f32 %v527, %v559
    %v592 = vadd.f32 %v528, %v560
    %v593 = vadd.f32 %v529, %v561
    %v594 = vld [vmem:[%s1] sm:$0xff]
    %v595 = vld [vmem:[%s1 + $0x8] sm:$0xff]
    %v596 = vld [vmem:[%s1 + $0x10] sm:$0xff]
    %v597 = vld [vmem:[%s1 + $0x18] sm:$0xff]
    %v598 = vld [vmem:[%s1 + $0x20] sm:$0xff]
    %v599 = vld [vmem:[%s1 + $0x28] sm:$0xff]
    %v600 = vld [vmem:[%s1 + $0x30] sm:$0xff]
    %v601 = vld [vmem:[%s1 + $0x38] sm:$0xff]
    %v602 = vld [vmem:[%s1 + $0x40] sm:$0xff]
    %v603 = vld [vmem:[%s1 + $0x48] sm:$0xff]
    %v604 = vld [vmem:[%s1 + $0x50] sm:$0xff]
    %v605 = vld [vmem:[%s1 + $0x58] sm:$0xff]
    %v606 = vld [vmem:[%s1 + $0x60] sm:$0xff]
    %v607 = vld [vmem:[%s1 + $0x68] sm:$0xff]
    %v608 = vld [vmem:[%s1 + $0x70] sm:$0xff]
    %v609 = vld [vmem:[%s1 + $0x78] sm:$0xff]
    %610 = vmatprep.subr.mxu0 0.0
    %611 = vmatpush1.msra.mxu0 %v594
    %612 = vmatprep.subr.mxu0 0.0
    %613 = vmatpush1.msra.mxu0 %v595
    %614 = vmatprep.subr.mxu0 0.0
    %615 = vmatpush1.msra.mxu0 %v596
    %616 = vmatprep.subr.mxu0 0.0
    %617 = vmatpush1.msra.mxu0 %v597
    %618 = vmatprep.subr.mxu0 0.0
    %619 = vmatpush1.msra.mxu0 %v598
    %620 = vmatprep.subr.mxu0 0.0
    %621 = vmatpush1.msra.mxu0 %v599
    %622 = vmatprep.subr.mxu0 0.0
    %623 = vmatpush1.msra.mxu0 %v600
    %624 = vmatprep.subr.mxu0 0.0
    %625 = vmatpush1.msra.mxu0 %v601
    %626 = vmatprep.subr.mxu0 0.0
    %627 = vmatpush1.msra.mxu0 %v602
    %628 = vmatprep.subr.mxu0 0.0
    %629 = vmatpush1.msra.mxu0 %v603
    %630 = vmatprep.subr.mxu0 0.0
    %631 = vmatpush1.msra.mxu0 %v604
    %632 = vmatprep.subr.mxu0 0.0
    %633 = vmatpush1.msra.mxu0 %v605
    %634 = vmatprep.subr.mxu0 0.0
    %635 = vmatpush1.msra.mxu0 %v606
    %636 = vmatprep.subr.mxu0 0.0
    %637 = vmatpush1.msra.mxu0 %v607
    %638 = vmatprep.subr.mxu0 0.0
    %639 = vmatpush1.msra.mxu0 %v608
    %640 = vmatprep.subr.mxu0 0.0
    %641 = vmatpush1.msra.mxu0 %v609
    %642 = vmatprep.subr.mxu0 0.0
    %643 = vmatpush1.msra.mxu0 0.0
    %644 = vmatprep.subr.mxu0 0.0
    %645 = vmatpush1.msra.mxu0 0.0
    %646 = vmatprep.subr.mxu0 0.0
    %647 = vmatpush1.msra.mxu0 0.0
    %648 = vmatprep.subr.mxu0 0.0
    %649 = vmatpush1.msra.mxu0 0.0
    %650 = vmatprep.subr.mxu0 0.0
    %651 = vmatpush1.msra.mxu0 0.0
    %652 = vmatprep.subr.mxu0 0.0
    %653 = vmatpush1.msra.mxu0 0.0
    %654 = vmatprep.subr.mxu0 0.0
    %655 = vmatpush1.msra.mxu0 0.0
    %656 = vmatprep.subr.mxu0 0.0
    %657 = vmatpush1.msra.mxu0 0.0
    %658 = vmatprep.subr.mxu0 0.0
    %659 = vmatpush1.msra.mxu0 0.0
    %660 = vmatprep.subr.mxu0 0.0
    %661 = vmatpush1.msra.mxu0 0.0
    %662 = vmatprep.subr.mxu0 0.0
    %663 = vmatpush1.msra.mxu0 0.0
    %664 = vmatprep.subr.mxu0 0.0
    %665 = vmatpush1.msra.mxu0 0.0
    %666 = vmatprep.subr.mxu0 0.0
    %667 = vmatpush1.msra.mxu0 0.0
    %668 = vmatprep.subr.mxu0 0.0
    %669 = vmatpush1.msra.mxu0 0.0
    %670 = vmatprep.subr.mxu0 0.0
    %671 = vmatpush1.msra.mxu0 0.0
    %672 = vmatprep.subr.mxu0 0.0
    %673 = vmatpush1.msra.mxu0 0.0
    %674 = vmatprep.mubr.f32.mxu0 0.0
    %675 = vmatmul.mubr.f32.gmra.mrb[0].mxu0 %v562
    %v676 = vpop.f32.mrb[0].mxu0
    %v677 = vadd.f32 0.0, %v676
    %v678 = vpop.f32.mrb[0].mxu0
    %679 = vmatprep.mubr.f32.mxu0 0.0
    %680 = vmatmul.mubr.f32.gmra.mrb[0].mxu0 %v563
    %v681 = vpop.f32.mrb[0].mxu0
    %v682 = vadd.f32 0.0, %v681
    %v683 = vpop.f32.mrb[0].mxu0
    %684 = vmatprep.mubr.f32.mxu0 0.0
    %685 = vmatmul.mubr.f32.gmra.mrb[0].mxu0 %v564
    %v686 = vpop.f32.mrb[0].mxu0
    %v687 = vadd.f32 0.0, %v686
    %v688 = vpop.f32.mrb[0].mxu0
    %689 = vmatprep.mubr.f32.mxu0 0.0
    %690 = vmatmul.mubr.f32.gmra.mrb[0].mxu0 %v565
    %v691 = vpop.f32.mrb[0].mxu0
    %v692 = vadd.f32 0.0, %v691
    %v693 = vpop.f32.mrb[0].mxu0
    %694 = vmatprep.mubr.f32.mxu0 0.0
    %695 = vmatmul.mubr.f32.gmra.mrb[0].mxu0 %v566
    %v696 = vpop.f32.mrb[0].mxu0
    %v697 = vadd.f32 0.0, %v696
    %v698 = vpop.f32.mrb[0].mxu0
    %699 = vmatprep.mubr.f32.mxu0 0.0
    %700 = vmatmul.mubr.f32.gmra.mrb[0].mxu0 %v567
    %v701 = vpop.f32.mrb[0].mxu0
    %v702 = vadd.f32 0.0, %v701
    %v703 = vpop.f32.mrb[0].mxu0
    %704 = vmatprep.mubr.f32.mxu0 0.0
    %705 = vmatmul.mubr.f32.gmra.mrb[0].mxu0 %v568
    %v706 = vpop.f32.mrb[0].mxu0
    %v707 = vadd.f32 0.0, %v706
    %v708 = vpop.f32.mrb[0].mxu0
    %709 = vmatprep.mubr.f32.mxu0 0.0
    %710 = vmatmul.mubr.f32.gmra.mrb[0].mxu0 %v569
    %v711 = vpop.f32.mrb[0].mxu0
    %v712 = vadd.f32 0.0, %v711
    %v713 = vpop.f32.mrb[0].mxu0
    %714 = vmatprep.mubr.f32.mxu0 0.0
    %715 = vmatmul.mubr.f32.gmra.mrb[0].mxu0 %v570
    %v716 = vpop.f32.mrb[0].mxu0
    %v717 = vadd.f32 0.0, %v716
    %v718 = vpop.f32.mrb[0].mxu0
    %719 = vmatprep.mubr.f32.mxu0 0.0
    %720 = vmatmul.mubr.f32.gmra.mrb[0].mxu0 %v571
    %v721 = vpop.f32.mrb[0].mxu0
    %v722 = vadd.f32 0.0, %v721
    %v723 = vpop.f32.mrb[0].mxu0
    %724 = vmatprep.mubr.f32.mxu0 0.0
    %725 = vmatmul.mubr.f32.gmra.mrb[0].mxu0 %v572
    %v726 = vpop.f32.mrb[0].mxu0
    %v727 = vadd.f32 0.0, %v726
    %v728 = vpop.f32.mrb[0].mxu0
    %729 = vmatprep.mubr.f32.mxu0 0.0
    %730 = vmatmul.mubr.f32.gmra.mrb[0].mxu0 %v573
    %v731 = vpop.f32.mrb[0].mxu0
    %v732 = vadd.f32 0.0, %v731
    %v733 = vpop.f32.mrb[0].mxu0
    %734 = vmatprep.mubr.f32.mxu0 0.0
    %735 = vmatmul.mubr.f32.gmra.mrb[0].mxu0 %v574
    %v736 = vpop.f32.mrb[0].mxu0
    %v737 = vadd.f32 0.0, %v736
    %v738 = vpop.f32.mrb[0].mxu0
    %739 = vmatprep.mubr.f32.mxu0 0.0
    %740 = vmatmul.mubr.f32.gmra.mrb[0].mxu0 %v575
    %v741 = vpop.f32.mrb[0].mxu0
    %v742 = vadd.f32 0.0, %v741
    %v743 = vpop.f32.mrb[0].mxu0
    %744 = vmatprep.mubr.f32.mxu0 0.0
    %745 = vmatmul.mubr.f32.gmra.mrb[0].mxu0 %v576
    %v746 = vpop.f32.mrb[0].mxu0
    %v747 = vadd.f32 0.0, %v746
    %v748 = vpop.f32.mrb[0].mxu0
    %749 = vmatprep.mubr.f32.mxu0 0.0
    %750 = vmatmul.mubr.f32.gmra.mrb[0].mxu0 %v577
    %v751 = vpop.f32.mrb[0].mxu0
    %v752 = vadd.f32 0.0, %v751
    %v753 = vpop.f32.mrb[0].mxu0
    %754 = vmatprep.mubr.f32.mxu0 0.0
    %755 = vmatmul.mubr.f32.gmra.mrb[0].mxu0 %v578
    %v756 = vpop.f32.mrb[0].mxu0
    %v757 = vadd.f32 0.0, %v756
    %v758 = vpop.f32.mrb[0].mxu0
    %759 = vmatprep.mubr.f32.mxu0 0.0
    %760 = vmatmul.mubr.f32.gmra.mrb[0].mxu0 %v579
    %v761 = vpop.f32.mrb[0].mxu0
    %v762 = vadd.f32 0.0, %v761
    %v763 = vpop.f32.mrb[0].mxu0
    %764 = vmatprep.mubr.f32.mxu0 0.0
    %765 = vmatmul.mubr.f32.gmra.mrb[0].mxu0 %v580
    %v766 = vpop.f32.mrb[0].mxu0
    %v767 = vadd.f32 0.0, %v766
    %v768 = vpop.f32.mrb[0].mxu0
    %769 = vmatprep.mubr.f32.mxu0 0.0
    %770 = vmatmul.mubr.f32.gmra.mrb[0].mxu0 %v581
    %v771 = vpop.f32.mrb[0].mxu0
    %v772 = vadd.f32 0.0, %v771
    %v773 = vpop.f32.mrb[0].mxu0
    %774 = vmatprep.mubr.f32.mxu0 0.0
    %775 = vmatmul.mubr.f32.gmra.mrb[0].mxu0 %v582
    %v776 = vpop.f32.mrb[0].mxu0
    %v777 = vadd.f32 0.0, %v776
    %v778 = vpop.f32.mrb[0].mxu0
    %779 = vmatprep.mubr.f32.mxu0 0.0
    %780 = vmatmul.mubr.f32.gmra.mrb[0].mxu0 %v583
    %v781 = vpop.f32.mrb[0].mxu0
    %v782 = vadd.f32 0.0, %v781
    %v783 = vpop.f32.mrb[0].mxu0
    %784 = vmatprep.mubr.f32.mxu0 0.0
    %785 = vmatmul.mubr.f32.gmra.mrb[0].mxu0 %v584
    %v786 = vpop.f32.mrb[0].mxu0
    %v787 = vadd.f32 0.0, %v786
    %v788 = vpop.f32.mrb[0].mxu0
    %789 = vmatprep.mubr.f32.mxu0 0.0
    %790 = vmatmul.mubr.f32.gmra.mrb[0].mxu0 %v585
    %v791 = vpop.f32.mrb[0].mxu0
    %v792 = vadd.f32 0.0, %v791
    %v793 = vpop.f32.mrb[0].mxu0
    %794 = vmatprep.mubr.f32.mxu0 0.0
    %795 = vmatmul.mubr.f32.gmra.mrb[0].mxu0 %v586
    %v796 = vpop.f32.mrb[0].mxu0
    %v797 = vadd.f32 0.0, %v796
    %v798 = vpop.f32.mrb[0].mxu0
    %799 = vmatprep.mubr.f32.mxu0 0.0
    %800 = vmatmul.mubr.f32.gmra.mrb[0].mxu0 %v587
    %v801 = vpop.f32.mrb[0].mxu0
    %v802 = vadd.f32 0.0, %v801
    %v803 = vpop.f32.mrb[0].mxu0
    %804 = vmatprep.mubr.f32.mxu0 0.0
    %805 = vmatmul.mubr.f32.gmra.mrb[0].mxu0 %v588
    %v806 = vpop.f32.mrb[0].mxu0
    %v807 = vadd.f32 0.0, %v806
    %v808 = vpop.f32.mrb[0].mxu0
    %809 = vmatprep.mubr.f32.mxu0 0.0
    %810 = vmatmul.mubr.f32.gmra.mrb[0].mxu0 %v589
    %v811 = vpop.f32.mrb[0].mxu0
    %v812 = vadd.f32 0.0, %v811
    %v813 = vpop.f32.mrb[0].mxu0
    %814 = vmatprep.mubr.f32.mxu0 0.0
    %815 = vmatmul.mubr.f32.gmra.mrb[0].mxu0 %v590
    %v816 = vpop.f32.mrb[0].mxu0
    %v817 = vadd.f32 0.0, %v816
    %v818 = vpop.f32.mrb[0].mxu0
    %819 = vmatprep.mubr.f32.mxu0 0.0
    %820 = vmatmul.mubr.f32.gmra.mrb[0].mxu0 %v591
    %v821 = vpop.f32.mrb[0].mxu0
    %v822 = vadd.f32 0.0, %v821
    %v823 = vpop.f32.mrb[0].mxu0
    %824 = vmatprep.mubr.f32.mxu0 0.0
    %825 = vmatmul.mubr.f32.gmra.mrb[0].mxu0 %v592
    %v826 = vpop.f32.mrb[0].mxu0
    %v827 = vadd.f32 0.0, %v826
    %v828 = vpop.f32.mrb[0].mxu0
    %829 = vmatprep.mubr.f32.mxu0 0.0
    %830 = vmatmul.mubr.f32.gmra.mrb[0].mxu0 %v593
    %v831 = vpop.f32.mrb[0].mxu0
    %v832 = vadd.f32 0.0, %v831
    %v833 = vpop.f32.mrb[0].mxu0
    %834 = vdwg.mxu0
    %v835 = vmax.f32 %v677, 0.0
    %v836 = vmax.f32 %v682, 0.0
    %v837 = vmax.f32 %v687, 0.0
    %v838 = vmax.f32 %v692, 0.0
    %v839 = vmax.f32 %v697, 0.0
    %v840 = vmax.f32 %v702, 0.0
    %v841 = vmax.f32 %v707, 0.0
    %v842 = vmax.f32 %v712, 0.0
    %v843 = vmax.f32 %v717, 0.0
    %v844 = vmax.f32 %v722, 0.0
    %v845 = vmax.f32 %v727, 0.0
    %v846 = vmax.f32 %v732, 0.0
    %v847 = vmax.f32 %v737, 0.0
    %v848 = vmax.f32 %v742, 0.0
    %v849 = vmax.f32 %v747, 0.0
    %v850 = vmax.f32 %v752, 0.0
    %v851 = vmax.f32 %v757, 0.0
    %v852 = vmax.f32 %v762, 0.0
    %v853 = vmax.f32 %v767, 0.0
    %v854 = vmax.f32 %v772, 0.0
    %v855 = vmax.f32 %v777, 0.0
    %v856 = vmax.f32 %v782, 0.0
    %v857 = vmax.f32 %v787, 0.0
    %v858 = vmax.f32 %v792, 0.0
    %v859 = vmax.f32 %v797, 0.0
    %v860 = vmax.f32 %v802, 0.0
    %v861 = vmax.f32 %v807, 0.0
    %v862 = vmax.f32 %v812, 0.0
    %v863 = vmax.f32 %v817, 0.0
    %v864 = vmax.f32 %v822, 0.0
    %v865 = vmax.f32 %v827, 0.0
    %v866 = vmax.f32 %v832, 0.0
    %867 = vst [vmem:[%s4] sm:$0xff] %v835
    %868 = vst [vmem:[%s4 + $0x8] sm:$0xff] %v836
    %869 = vst [vmem:[%s4 + $0x10] sm:$0xff] %v837
    %870 = vst [vmem:[%s4 + $0x18] sm:$0xff] %v838
    %871 = vst [vmem:[%s4 + $0x20] sm:$0xff] %v839
    %872 = vst [vmem:[%s4 + $0x28] sm:$0xff] %v840
    %873 = vst [vmem:[%s4 + $0x30] sm:$0xff] %v841
    %874 = vst [vmem:[%s4 + $0x38] sm:$0xff] %v842
    %875 = vst [vmem:[%s4 + $0x40] sm:$0xff] %v843
    %876 = vst [vmem:[%s4 + $0x48] sm:$0xff] %v844
    %877 = vst [vmem:[%s4 + $0x50] sm:$0xff] %v845
    %878 = vst [vmem:[%s4 + $0x58] sm:$0xff] %v846
    %879 = vst [vmem:[%s4 + $0x60] sm:$0xff] %v847
    %880 = vst [vmem:[%s4 + $0x68] sm:$0xff] %v848
    %881 = vst [vmem:[%s4 + $0x70] sm:$0xff] %v849
    %882 = vst [vmem:[%s4 + $0x78] sm:$0xff] %v850
    %883 = vst [vmem:[%s4 + $0x80] sm:$0xff] %v851
    %884 = vst [vmem:[%s4 + $0x88] sm:$0xff] %v852
    %885 = vst [vmem:[%s4 + $0x90] sm:$0xff] %v853
    %886 = vst [vmem:[%s4 + $0x98] sm:$0xff] %v854
    %887 = vst [vmem:[%s4 + $0xa0] sm:$0xff] %v855
    %888 = vst [vmem:[%s4 + $0xa8] sm:$0xff] %v856
    %889 = vst [vmem:[%s4 + $0xb0] sm:$0xff] %v857
    %890 = vst [vmem:[%s4 + $0xb8] sm:$0xff] %v858
    %891 = vst [vmem:[%s4 + $0xc0] sm:$0xff] %v859
    %892 = vst [vmem:[%s4 + $0xc8] sm:$0xff] %v860
    %893 = vst [vmem:[%s4 + $0xd0] sm:$0xff] %v861
    %894 = vst [vmem:[%s4 + $0xd8] sm:$0xff] %v862
    %895 = vst [vmem:[%s4 + $0xe0] sm:$0xff] %v863
    %896 = vst [vmem:[%s4 + $0xe8] sm:$0xff] %v864
    %897 = vst [vmem:[%s4 + $0xf0] sm:$0xff] %v865
    %898 = vst [vmem:[%s4 + $0xf8] sm:$0xff] %v866
  $region25: #{combined_model_forward.1} parent=0 // pred_fallthru
    _
  // Predicated region
  $region26: #{combined_model_forward.1} parent=0 // pred_check
    _
  $region27: #{combined_model_forward.1} parent=0 // pred_check_branch
    %900 = sbr.rel (0) target = $region29
  $region28: #{combined_model_forward.1} parent=0 // pred_region
    _
  $region29: #{combined_model_forward.1} parent=0 // pred_fallthru
    _
  // Predicated region
  $region30: #{combined_model_forward.1} parent=0 // pred_check
    _
  $region31: #{combined_model_forward.1} parent=0 // pred_check_branch
    %902 = sbr.rel (0) target = $region33
  $region32: #{combined_model_forward.1} parent=0 // pred_region
    _
  $region33: #{combined_model_forward.1} parent=0 // pred_fallthru
    _

</llo_original>
